<compile_context>
chip_gen: v6e
topology: v6e:2x2x1
jax: 0.10.0
libtpu: 0.0.40
codegen_flags: <defaults>
</compile_context>

<pallas_src>
import jax
import jax.numpy as jnp
import numpy as np
from jax import lax
from jax.experimental import pallas as pl
from jax.experimental.pallas import tpu as pltpu

FILTER_SIZES = (1, 2, 3, 5)
KMAX = max(FILTER_SIZES)
NF = len(FILTER_SIZES)
NUM_FILTERS = 128          # out_channels of every Conv1d in the module
LANE = 128
SUBLANE = 8

TARGET_M = 1024            # matmul rows per grid step (review: 512-1024)


def _round_up(x, m):
    return ((x + m - 1) // m) * m


def make_cnn_kernel(TB, L, L_pad, C):
    def kernel(x_ref, wall_ref, wl_ref, bl_ref, out_ref):
        # x_ref   : [TB*L_pad, K_pad]  bf16  im2col rows (taps + bias-1 column)
        # wall_ref: [K_pad, NF*C]      bf16  fused conv weights (+ bias row)
        # wl_ref  : [NF*C, NT_pad]     bf16  linear weight
        # bl_ref  : [1, NT_pad]        f32   linear bias
        # out_ref : [TB, NT_pad]       f32
        # One lane-dense MXU matmul covers all filters, all taps and the conv
        # biases (folded via the constant-1 column of x).
        p = jnp.dot(x_ref[...], wall_ref[...],
                    preferred_element_type=jnp.float32)            # [M, NF*C]
        p = jnp.maximum(p, 0.0)                                    # ReLU, whole slab
        p = p.reshape(TB, L_pad, NF * C)                           # layout-preserving

        # Tiny time-index mask source; jnp.where broadcasts it over TB.
        t_idx = lax.broadcasted_iota(jnp.int32, (1, L_pad, C), 1)

        pooled = []
        for fi, k in enumerate(FILTER_SIZES):
            conv = p[:, :, fi * C:(fi + 1) * C]                    # [TB, L_pad, C]
            # Positions t > L - k (incl. zero-padded rows) are invalid; the ReLU
            # output is >= 0, so the -1.0 sentinel excludes them from the max.
            conv = jnp.where(t_idx < (L - k + 1), conv, -1.0)
            pooled.append(jnp.max(conv, axis=1))                   # [TB, C]
        feat = jnp.concatenate(pooled, axis=-1)                    # [TB, NF*C] lane concat

        # TODO(synk): nn.Dropout is identity in eval mode; a training-mode RNG
        # dropout mask (pltpu.prng_*) is not implemented.
        logits = jnp.dot(feat.astype(jnp.bfloat16), wl_ref[...],
                         preferred_element_type=jnp.float32)       # [TB, NT_pad]
        out_ref[...] = logits + bl_ref[...]

    return kernel


def _choose_tiling(B, L_pad):
    """Sequences per grid step (multiple of 8) and the padded batch size."""
    # ~TARGET_M matmul rows per step amortizes the ~0.35us/step overhead; the
    # [M, 512] f32 intermediate at M=1024 is ~2 MiB, comfortably inside v5e's
    # 16 MiB scoped default and v7x's 64 MiB physical VMEM.
    tb = max(SUBLANE, TARGET_M // L_pad // SUBLANE * SUBLANE)
    b8 = _round_up(B, SUBLANE)
    if b8 >= 2 * SUBLANE:
        # Keep the grid >= 2 steps so the "parallel" batch axis can feed both
        # of v7x's TensorCores (harmless on single-TC v5e/v6e).
        tb = min(tb, _round_up((b8 + 1) // 2, SUBLANE))
    else:
        # Tiny batch: one step covering the 8-padded batch (no giant padding).
        tb = b8
    b_pad = _round_up(B, tb)
    return tb, b_pad


def cnn_forward(indices, emb_table, conv_ws, conv_bs, wl, bl):
    B, L = indices.shape
    E = emb_table.shape[1]
    C = conv_ws[0].shape[-1]
    ntags = wl.shape[-1]
    assert L >= KMAX, "Conv1d(kernel_size=5) requires seq_len >= 5 (as in PyTorch)"

    L_pad = _round_up(L, SUBLANE)
    NT_pad = _round_up(ntags, LANE)
    TB, B_pad = _choose_tiling(B, L_pad)
    K_in = KMAX * E + 1                       # all taps + constant-1 bias column
    K_pad = _round_up(K_in, SUBLANE)

    # ---- XLA glue: embedding gather + im2col on the contraction dim ---------
    emb = jnp.take(emb_table, indices, axis=0)                       # [B, L, E]
    emb = jnp.pad(emb, ((0, B_pad - B), (0, L_pad - L + KMAX - 1), (0, 0)))
    # Row for (b, t) = [emb[b,t], ..., emb[b,t+KMAX-1], 1.0, 0-pad].
    win = jnp.concatenate([emb[:, j:j + L_pad, :] for j in range(KMAX)], axis=-1)
    ones = jnp.ones((B_pad, L_pad, 1), emb.dtype)
    zpad = jnp.zeros((B_pad, L_pad, K_pad - K_in), emb.dtype)
    x = jnp.concatenate([win, ones, zpad], axis=-1)
    x = x.reshape(B_pad * L_pad, K_pad).astype(jnp.bfloat16)

    # ---- fused conv weight slab [K_pad, NF*C]: taps j >= k zeroed, bias row --
    blocks = []
    for k, w, b in zip(FILTER_SIZES, conv_ws, conv_bs):
        blk = jnp.concatenate(
            [w.reshape(k * E, C),
             jnp.zeros(((KMAX - k) * E, C), w.dtype),
             b.reshape(1, C),
             jnp.zeros((K_pad - K_in, C), w.dtype)], axis=0)         # [K_pad, C]
        blocks.append(blk)
    wall = jnp.concatenate(blocks, axis=1).astype(jnp.bfloat16)      # [K_pad, NF*C]

    wl_pad = jnp.pad(wl, ((0, 0), (0, NT_pad - ntags))).astype(jnp.bfloat16)
    bl_pad = jnp.pad(bl.reshape(1, ntags), ((0, 0), (0, NT_pad - ntags)))

    out = pl.pallas_call(
        make_cnn_kernel(TB, L, L_pad, C),
        out_shape=jax.ShapeDtypeStruct((B_pad, NT_pad), jnp.float32),
        grid=(B_pad // TB,),
        in_specs=[
            pl.BlockSpec((TB * L_pad, K_pad), lambda b: (b, 0)),
            # Loop-invariant operands (constant index maps).  Single-buffering
            # (pl.Buffered(1)) would shave ~300 KB of VMEM but is skipped for
            # portability; the duplicate buffers are tiny vs the VMEM budget.
            pl.BlockSpec((K_pad, NF * C), lambda b: (0, 0)),
            pl.BlockSpec((NF * C, NT_pad), lambda b: (0, 0)),
            pl.BlockSpec((1, NT_pad), lambda b: (0, 0)),
        ],
        out_specs=pl.BlockSpec((TB, NT_pad), lambda b: (b, 0)),
        compiler_params=pltpu.CompilerParams(
            dimension_semantics=("parallel",),
            vmem_limit_bytes=32 * 1024 * 1024),
    )(x, wall, wl_pad, bl_pad)
    return out[:B, :ntags]


def ref_forward(indices, emb_table, conv_ws, conv_bs, wl, bl):
    """Pure-JAX f32 reference matching the PyTorch forward (eval mode)."""
    B, L = indices.shape
    emb = emb_table[indices]                                         # [B, L, E]
    feats = []
    for k, w, bias in zip(FILTER_SIZES, conv_ws, conv_bs):
        l_out = L - k + 1
        acc = jnp.zeros((B, l_out, w.shape[-1]), jnp.float32)
        for j in range(k):
            acc = acc + jnp.einsum('ble,ec->blc', emb[:, j:j + l_out, :], w[j])
        acc = jax.nn.relu(acc + bias[None])
        feats.append(jnp.max(acc, axis=1))
    feat = jnp.concatenate(feats, axis=-1)
    return feat @ wl + bl


if __name__ == "__main__":
    # Small shapes consistent with the module's forward.
    VOCAB = 50      # input_size
    EMB = 32        # emb_size
    NTAGS = 10      # ntags
    B, L = 2, 8     # batch, sequence length
    C = NUM_FILTERS

    key = jax.random.PRNGKey(0)
    keys = jax.random.split(key, 2 + 2 * len(FILTER_SIZES) + 2)

    emb_table = jax.random.normal(keys[0], (VOCAB, EMB), jnp.float32) * 0.1
    indices = jax.random.randint(keys[1], (B, L), 0, VOCAB)

    conv_ws, conv_bs = [], []
    for i, k in enumerate(FILTER_SIZES):
        # PyTorch conv weight is [C_out=128, C_in=EMB, k]; stored here as
        # [k, EMB, C_out] (transposed per tap) so it drops straight into matmuls.
        conv_ws.append(jax.random.normal(keys[2 + 2 * i], (k, EMB, C), jnp.float32) * 0.05)
        conv_bs.append(jax.random.normal(keys[3 + 2 * i], (1, C), jnp.float32) * 0.05)

    wl = jax.random.normal(keys[-2], (len(FILTER_SIZES) * C, NTAGS), jnp.float32) * 0.05
    bl = jax.random.normal(keys[-1], (1, NTAGS), jnp.float32) * 0.05

    logits = cnn_forward(indices, emb_table, conv_ws, conv_bs, wl, bl)
    jax.block_until_ready(logits)

    expected = ref_forward(indices, emb_table, conv_ws, conv_bs, wl, bl)
    # bf16 MXU operands in the kernel vs f32 reference -> loosened tolerance.
    np.testing.assert_allclose(np.asarray(logits), np.asarray(expected),
                               rtol=2e-2, atol=2e-2)
    assert logits.shape == (B, NTAGS)

    print("KERNEL_OK")
</pallas_src>

<mosaic_0001>
module attributes {stable_mosaic.version = 11 : i64} {
  func.func @kernel(%arg0: i32, %arg1: memref<64x168xbf16, #tpu.memory_space<vmem>>, %arg2: memref<168x512xbf16, #tpu.memory_space<vmem>>, %arg3: memref<512x128xbf16, #tpu.memory_space<vmem>>, %arg4: memref<1x128xf32, #tpu.memory_space<vmem>>, %arg5: memref<8x128xf32, #tpu.memory_space<vmem>>) attributes {dimension_semantics = [#tpu.dimension_semantics<parallel>], iteration_bounds = array<i64: 1>, scalar_prefetch = 0 : i64, scratch_operands = 0 : i64, tpu.core_type = #tpu.core_type<tc>, window_params = [{transform_indices = @transform_0, window_bounds = array<i64: 64, 168>}, {pipeline_mode = #tpu.pipeline_mode<synchronous>, transform_indices = @transform_1, window_bounds = array<i64: 168, 512>}, {pipeline_mode = #tpu.pipeline_mode<synchronous>, transform_indices = @transform_2, window_bounds = array<i64: 512, 128>}, {pipeline_mode = #tpu.pipeline_mode<synchronous>, transform_indices = @transform_3, window_bounds = array<i64: 1, 128>}, {transform_indices = @transform_4, window_bounds = array<i64: 8, 128>}]} {
    %c0 = arith.constant 0 : index
    %c0_0 = arith.constant 0 : index
    %0 = vector.load %arg1[%c0, %c0_0] : memref<64x168xbf16, #tpu.memory_space<vmem>>, vector<64x168xbf16>
    %c0_1 = arith.constant 0 : index
    %c0_2 = arith.constant 0 : index
    %1 = vector.load %arg2[%c0_1, %c0_2] : memref<168x512xbf16, #tpu.memory_space<vmem>>, vector<168x512xbf16>
    %cst = arith.constant dense<0.000000e+00> : vector<64x512xf32>
    %2 = tpu.matmul %0, %1, %cst {dimension_numbers = #tpu.dot_dimension_numbers<[1], [0], [0], [1], [0, 0, 1, 1], [], []>} : vector<64x168xbf16>, vector<168x512xbf16>, vector<64x512xf32> -> vector<64x512xf32>
    %cst_3 = arith.constant 0.000000e+00 : f32
    %3 = vector.broadcast %cst_3 : f32 to vector<64x512xf32>
    %4 = arith.maximumf %2, %3 : vector<64x512xf32>
    %5 = vector.shape_cast %4 : vector<64x512xf32> to vector<8x8x512xf32>
    %6 = tpu.iota {dimensions = array<i32: 1>} : vector<1x8x128xi32>
    %7 = vector.extract_strided_slice %5 {offsets = [0, 0, 0], sizes = [8, 8, 128], strides = [1, 1, 1]} : vector<8x8x512xf32> to vector<8x8x128xf32>
    %c8_i32 = arith.constant 8 : i32
    %8 = vector.broadcast %c8_i32 : i32 to vector<1x8x128xi32>
    %9 = arith.cmpi slt, %6, %8 : vector<1x8x128xi32>
    %cst_4 = arith.constant -1.000000e+00 : f32
    %10 = vector.shape_cast %9 : vector<1x8x128xi1> to vector<1x8x128xi1>
    %11 = vector.broadcast %10 : vector<1x8x128xi1> to vector<8x8x128xi1>
    %12 = vector.broadcast %cst_4 : f32 to vector<8x8x128xf32>
    %13 = arith.select %11, %7, %12 : vector<8x8x128xi1>, vector<8x8x128xf32>
    %cst_5 = arith.constant dense<0xFF800000> : vector<8x128xf32>
    %14 = vector.multi_reduction <maximumf>, %13, %cst_5 [1] : vector<8x8x128xf32> to vector<8x128xf32>
    %15 = vector.extract_strided_slice %5 {offsets = [0, 0, 128], sizes = [8, 8, 128], strides = [1, 1, 1]} : vector<8x8x512xf32> to vector<8x8x128xf32>
    %c7_i32 = arith.constant 7 : i32
    %16 = vector.broadcast %c7_i32 : i32 to vector<1x8x128xi32>
    %17 = arith.cmpi slt, %6, %16 : vector<1x8x128xi32>
    %cst_6 = arith.constant -1.000000e+00 : f32
    %18 = vector.shape_cast %17 : vector<1x8x128xi1> to vector<1x8x128xi1>
    %19 = vector.broadcast %18 : vector<1x8x128xi1> to vector<8x8x128xi1>
    %20 = vector.broadcast %cst_6 : f32 to vector<8x8x128xf32>
    %21 = arith.select %19, %15, %20 : vector<8x8x128xi1>, vector<8x8x128xf32>
    %cst_7 = arith.constant dense<0xFF800000> : vector<8x128xf32>
    %22 = vector.multi_reduction <maximumf>, %21, %cst_7 [1] : vector<8x8x128xf32> to vector<8x128xf32>
    %23 = vector.extract_strided_slice %5 {offsets = [0, 0, 256], sizes = [8, 8, 128], strides = [1, 1, 1]} : vector<8x8x512xf32> to vector<8x8x128xf32>
    %c6_i32 = arith.constant 6 : i32
    %24 = vector.broadcast %c6_i32 : i32 to vector<1x8x128xi32>
    %25 = arith.cmpi slt, %6, %24 : vector<1x8x128xi32>
    %cst_8 = arith.constant -1.000000e+00 : f32
    %26 = vector.shape_cast %25 : vector<1x8x128xi1> to vector<1x8x128xi1>
    %27 = vector.broadcast %26 : vector<1x8x128xi1> to vector<8x8x128xi1>
    %28 = vector.broadcast %cst_8 : f32 to vector<8x8x128xf32>
    %29 = arith.select %27, %23, %28 : vector<8x8x128xi1>, vector<8x8x128xf32>
    %cst_9 = arith.constant dense<0xFF800000> : vector<8x128xf32>
    %30 = vector.multi_reduction <maximumf>, %29, %cst_9 [1] : vector<8x8x128xf32> to vector<8x128xf32>
    %31 = vector.extract_strided_slice %5 {offsets = [0, 0, 384], sizes = [8, 8, 128], strides = [1, 1, 1]} : vector<8x8x512xf32> to vector<8x8x128xf32>
    %c4_i32 = arith.constant 4 : i32
    %32 = vector.broadcast %c4_i32 : i32 to vector<1x8x128xi32>
    %33 = arith.cmpi slt, %6, %32 : vector<1x8x128xi32>
    %cst_10 = arith.constant -1.000000e+00 : f32
    %34 = vector.shape_cast %33 : vector<1x8x128xi1> to vector<1x8x128xi1>
    %35 = vector.broadcast %34 : vector<1x8x128xi1> to vector<8x8x128xi1>
    %36 = vector.broadcast %cst_10 : f32 to vector<8x8x128xf32>
    %37 = arith.select %35, %31, %36 : vector<8x8x128xi1>, vector<8x8x128xf32>
    %cst_11 = arith.constant dense<0xFF800000> : vector<8x128xf32>
    %38 = vector.multi_reduction <maximumf>, %37, %cst_11 [1] : vector<8x8x128xf32> to vector<8x128xf32>
    %39 = tpu.concatenate %14, %22, %30, %38 in 1 : vector<8x128xf32>, vector<8x128xf32>, vector<8x128xf32>, vector<8x128xf32> -> vector<8x512xf32>
    %40 = arith.truncf %39 : vector<8x512xf32> to vector<8x512xbf16>
    %c0_12 = arith.constant 0 : index
    %c0_13 = arith.constant 0 : index
    %41 = vector.load %arg3[%c0_12, %c0_13] : memref<512x128xbf16, #tpu.memory_space<vmem>>, vector<512x128xbf16>
    %cst_14 = arith.constant dense<0.000000e+00> : vector<8x128xf32>
    %42 = tpu.matmul %40, %41, %cst_14 {dimension_numbers = #tpu.dot_dimension_numbers<[1], [0], [0], [1], [0, 0, 1, 1], [], []>} : vector<8x512xbf16>, vector<512x128xbf16>, vector<8x128xf32> -> vector<8x128xf32>
    %c0_15 = arith.constant 0 : index
    %c0_16 = arith.constant 0 : index
    %43 = vector.load %arg4[%c0_15, %c0_16] : memref<1x128xf32, #tpu.memory_space<vmem>>, vector<1x128xf32>
    %44 = vector.broadcast %43 : vector<1x128xf32> to vector<8x128xf32>
    %45 = arith.addf %42, %44 : vector<8x128xf32>
    %c0_17 = arith.constant 0 : index
    %c0_18 = arith.constant 0 : index
    %46 = vector.load %arg5[%c0_17, %c0_18] : memref<8x128xf32, #tpu.memory_space<vmem>>, vector<8x128xf32>
    tpu.vector_store %arg5[%c0_17, %c0_18], %45 {strides = array<i32>} : memref<8x128xf32, #tpu.memory_space<vmem>>, vector<8x128xf32>,
    return
  }
  func.func @transform_0(%arg0: i32) -> (i32, i32) {
    %c0_i32 = arith.constant 0 : i32
    %c0_i32_0 = arith.constant 0 : i32
    return %arg0, %c0_i32 : i32, i32
  }
  func.func @transform_1(%arg0: i32) -> (i32, i32) {
    %c0_i32 = arith.constant 0 : i32
    %c0_i32_0 = arith.constant 0 : i32
    %c0_i32_1 = arith.constant 0 : i32
    return %c0_i32, %c0_i32_0 : i32, i32
  }
  func.func @transform_2(%arg0: i32) -> (i32, i32) {
    %c0_i32 = arith.constant 0 : i32
    %c0_i32_0 = arith.constant 0 : i32
    %c0_i32_1 = arith.constant 0 : i32
    return %c0_i32, %c0_i32_0 : i32, i32
  }
  func.func @transform_3(%arg0: i32) -> (i32, i32) {
    %c0_i32 = arith.constant 0 : i32
    %c0_i32_0 = arith.constant 0 : i32
    %c0_i32_1 = arith.constant 0 : i32
    return %c0_i32, %c0_i32_0 : i32, i32
  }
  func.func @transform_4(%arg0: i32) -> (i32, i32) {
    %c0_i32 = arith.constant 0 : i32
    %c0_i32_0 = arith.constant 0 : i32
    return %arg0, %c0_i32 : i32, i32
  }
}

</mosaic_0001>

<llo_original>
// kernel: tpu_custom_call.1
$region0: #{tpu_custom_call.1}
  #allocation0 [shape = 'u32[]', space=smem, size = 0x4, offset = 0x4, fixed_abs, tag = 'smem constant byte address 0x4 - core index']
  #allocation1 [shape = 'u32[144,128]{1,0:T(1,128)}', space=vmem, size = 0x12000, scoped, tag = 'internal scratch']
  %s0 = inlined_call_operand.hbm [shape: bf16[64,168], index: 0, kind: input, shape index: {}]
  %s1 = inlined_call_operand.hbm [shape: bf16[168,512], index: 1, kind: input, shape index: {}]
  %s2 = inlined_call_operand.hbm [shape: bf16[512,128], index: 2, kind: input, shape index: {}]
  %s3 = inlined_call_operand.vmem [shape: f32[1,128], index: 3, kind: input, shape index: {}]
  %s4 = inlined_call_operand.hbm [shape: f32[8,128], index: 4, kind: output, shape index: {}]
  %s5 = sld [smem:[#allocation0]]
  $region38: #{tpu_custom_call.1} parent=0
    _
  %s7 = ssub.s32 1, %s5
  %s8 = scalar_select 0, %s7, %s5
  $region1: #{tpu_custom_call.1} parent=0
    #allocation2 [shape = 'u8[32768]{0}', space=vmem, size = 0x8000, scoped, tag = 'input window, operand 0, single buffered']
    #allocation3 [shape = 's32[1]{0}', space=sflag, size = 0x4, scoped, tag = 'scoped memory for tpu_custom_call.1']
    #allocation4 [shape = 's32[1]{0}', space=sflag, size = 0x4, scoped, tag = 'scoped memory for tpu_custom_call.1']
    #allocation5 [shape = 'u8[172032]{0}', space=vmem, size = 0x2a000, scoped, tag = 'input window, operand 1, single buffered']
    #allocation6 [shape = 's32[1]{0}', space=sflag, size = 0x4, scoped, tag = 'scoped memory for tpu_custom_call.1']
    #allocation7 [shape = 'u8[131072]{0}', space=vmem, size = 0x20000, scoped, tag = 'input window, operand 2, single buffered']
    #allocation8 [shape = 'u8[4096]{0}', space=vmem, size = 0x1000, scoped, tag = 'output window, operand 0, single buffered']
    %9 = vsyncpa [#allocation3], 0
    %10 = vsyncpa [#allocation6], 0
    %11 = vsyncpa [#allocation4], 0
    // Predicated region
    $region2: #{tpu_custom_call.1} parent=1 // pred_check
      _
    $region3: #{tpu_custom_call.1} parent=1 // pred_check_branch
      %13 = sbr.rel (0) target = $region5
    $region4: #{tpu_custom_call.1} parent=1 // pred_region
      %s15 = ssub.s32 1024, 1024
      %16 = vsyncadd [#allocation3], %s15
      %s17 = sshll.u32 [#allocation2], 4
      %s18 = int_to_ptr.vmem [resolvable:$true] %s17
      %23 = dma.hbm_to_vmem [thread:$0]  %s0, 1024, %s18, [#allocation3], 128, 128, 8
    $region5: #{tpu_custom_call.1} parent=1 // pred_fallthru
      _
    // Predicated region
    $region6: #{tpu_custom_call.1} parent=1 // pred_check
      _
    $region7: #{tpu_custom_call.1} parent=1 // pred_check_branch
      %25 = sbr.rel (0) target = $region9
    $region8: #{tpu_custom_call.1} parent=1 // pred_region
      %s27 = ssub.s32 5376, 5376
      %28 = vsyncadd [#allocation6], %s27
      %s29 = sshll.u32 [#allocation5], 4
      %s30 = int_to_ptr.vmem [resolvable:$true] %s29
      %35 = dma.hbm_to_vmem [thread:$0]  %s1, 5376, %s30, [#allocation6], 256, 256, 16
    $region9: #{tpu_custom_call.1} parent=1 // pred_fallthru
      _
    // Predicated region
    $region10: #{tpu_custom_call.1} parent=1 // pred_check
      _
    $region11: #{tpu_custom_call.1} parent=1 // pred_check_branch
      %37 = sbr.rel (0) target = $region13
    $region12: #{tpu_custom_call.1} parent=1 // pred_region
      %s39 = ssub.s32 4096, 4096
      %40 = vsyncadd [#allocation6], %s39
      %s41 = sshll.u32 [#allocation7], 4
      %s42 = int_to_ptr.vmem [resolvable:$true] %s41
      %47 = dma.hbm_to_vmem [thread:$0]  %s2, 4096, %s42, [#allocation6], 64, 64, 4
    $region13: #{tpu_custom_call.1} parent=1 // pred_fallthru
      _
    // Predicated region
    $region14: #{tpu_custom_call.1} parent=1 // pred_check
      _
    $region15: #{tpu_custom_call.1} parent=1 // pred_check_branch
      %49 = sbr.rel (0) target = $region17
    $region16: #{tpu_custom_call.1} parent=1 // pred_region
      _
    $region17: #{tpu_custom_call.1} parent=1 // pred_fallthru
      _
    // Predicated region
    $region18: #{tpu_custom_call.1} parent=1 // pred_check
      _
    $region19: #{tpu_custom_call.1} parent=1 // pred_check_branch
      %51 = sbr.rel (0) target = $region21
    $region20: #{tpu_custom_call.1} parent=1 // pred_region
      %52 = dma.done [#allocation3], 1024
    $region21: #{tpu_custom_call.1} parent=1 // pred_fallthru
      _
    // Predicated region
    $region22: #{tpu_custom_call.1} parent=1 // pred_check
      _
    $region23: #{tpu_custom_call.1} parent=1 // pred_check_branch
      %54 = sbr.rel (0) target = $region25
    $region24: #{tpu_custom_call.1} parent=1 // pred_region
      %55 = dma.done [#allocation6], 5376
    $region25: #{tpu_custom_call.1} parent=1 // pred_fallthru
      _
    // Predicated region
    $region26: #{tpu_custom_call.1} parent=1 // pred_check
      _
    $region27: #{tpu_custom_call.1} parent=1 // pred_check_branch
      %57 = sbr.rel (0) target = $region29
    $region28: #{tpu_custom_call.1} parent=1 // pred_region
      %58 = dma.done [#allocation6], 4096
    $region29: #{tpu_custom_call.1} parent=1 // pred_fallthru
      _
    %v60 = vld [vmem:[#allocation2] sm:$0xff]
    %v61 = vld [vmem:[#allocation2 + $0x8] sm:$0xff]
    %v62 = vld [vmem:[#allocation2 + $0x10] sm:$0xff]
    %v63 = vld [vmem:[#allocation2 + $0x18] sm:$0xff]
    %v64 = vld [vmem:[#allocation2 + $0x20] sm:$0xff]
    %v65 = vld [vmem:[#allocation2 + $0x28] sm:$0xff]
    %v66 = vld [vmem:[#allocation2 + $0x30] sm:$0xff]
    %v67 = vld [vmem:[#allocation2 + $0x38] sm:$0xff]
    %v68 = vld [vmem:[#allocation5] sm:$0xff]
    %v69 = vld [vmem:[#allocation5 + $0x8] sm:$0xff]
    %v70 = vld [vmem:[#allocation5 + $0x10] sm:$0xff]
    %v71 = vld [vmem:[#allocation5 + $0x18] sm:$0xff]
    %v72 = vld [vmem:[#allocation5 + $0x20] sm:$0xff]
    %v73 = vld [vmem:[#allocation5 + $0x28] sm:$0xff]
    %v74 = vld [vmem:[#allocation5 + $0x30] sm:$0xff]
    %v75 = vld [vmem:[#allocation5 + $0x38] sm:$0xff]
    %v76 = vld [vmem:[#allocation5 + $0x40] sm:$0xff]
    %v77 = vld [vmem:[#allocation5 + $0x48] sm:$0xff]
    %v78 = vld [vmem:[#allocation5 + $0x50] sm:$0xff]
    %v79 = vld [vmem:[#allocation5 + $0x58] sm:$0xff]
    %v80 = vld [vmem:[#allocation5 + $0x60] sm:$0xff]
    %v81 = vld [vmem:[#allocation5 + $0x68] sm:$0xff]
    %v82 = vld [vmem:[#allocation5 + $0x70] sm:$0xff]
    %v83 = vld [vmem:[#allocation5 + $0x78] sm:$0xff]
    %v84 = vld [vmem:[#allocation5 + $0x80] sm:$0xff]
    %v85 = vld [vmem:[#allocation5 + $0x88] sm:$0xff]
    %v86 = vld [vmem:[#allocation5 + $0x90] sm:$0xff]
    %v87 = vld [vmem:[#allocation5 + $0x98] sm:$0xff]
    %v88 = vld [vmem:[#allocation5 + $0xa0] sm:$0xff]
    %v89 = vld [vmem:[#allocation5 + $0xa8] sm:$0xff]
    %v90 = vld [vmem:[#allocation5 + $0xb0] sm:$0xff]
    %v91 = vld [vmem:[#allocation5 + $0xb8] sm:$0xff]
    %v92 = vld [vmem:[#allocation5 + $0xc0] sm:$0xff]
    %v93 = vld [vmem:[#allocation5 + $0xc8] sm:$0xff]
    %v94 = vld [vmem:[#allocation5 + $0xd0] sm:$0xff]
    %v95 = vld [vmem:[#allocation5 + $0xd8] sm:$0xff]
    %v96 = vld [vmem:[#allocation5 + $0xe0] sm:$0xff]
    %v97 = vld [vmem:[#allocation5 + $0xe8] sm:$0xff]
    %v98 = vld [vmem:[#allocation5 + $0xf0] sm:$0xff]
    %v99 = vld [vmem:[#allocation5 + $0xf8] sm:$0xff]
    %v100 = vld [vmem:[#allocation5 + $0x100] sm:$0xff]
    %v101 = vld [vmem:[#allocation5 + $0x108] sm:$0xff]
    %v102 = vld [vmem:[#allocation5 + $0x110] sm:$0xff]
    %v103 = vld [vmem:[#allocation5 + $0x118] sm:$0xff]
    %v104 = vld [vmem:[#allocation5 + $0x120] sm:$0xff]
    %v105 = vld [vmem:[#allocation5 + $0x128] sm:$0xff]
    %v106 = vld [vmem:[#allocation5 + $0x130] sm:$0xff]
    %v107 = vld [vmem:[#allocation5 + $0x138] sm:$0xff]
    %v108 = vld [vmem:[#allocation5 + $0x140] sm:$0xff]
    %v109 = vld [vmem:[#allocation5 + $0x148] sm:$0xff]
    %v118 = vunpack.c.l.b16 %v60
    %v119 = vunpack.c.h.b16 %v60
    %v120 = vunpack.c.l.b16 %v61
    %v121 = vunpack.c.h.b16 %v61
    %v122 = vunpack.c.l.b16 %v62
    %v123 = vunpack.c.h.b16 %v62
    %v124 = vunpack.c.l.b16 %v63
    %v125 = vunpack.c.h.b16 %v63
    %v126 = vunpack.c.l.b16 %v64
    %v127 = vunpack.c.h.b16 %v64
    %v128 = vunpack.c.l.b16 %v65
    %v129 = vunpack.c.h.b16 %v65
    %v130 = vunpack.c.l.b16 %v66
    %v131 = vunpack.c.h.b16 %v66
    %v132 = vunpack.c.l.b16 %v67
    %v133 = vunpack.c.h.b16 %v67
    %v134 = vpack.c.b16 %v120, %v118
    %v135 = vpack.c.b16 %v121, %v119
    %v136 = vpack.c.b16 %v124, %v122
    %v137 = vpack.c.b16 %v125, %v123
    %v138 = vpack.c.b16 %v128, %v126
    %v139 = vpack.c.b16 %v129, %v127
    %v140 = vpack.c.b16 %v132, %v130
    %v141 = vpack.c.b16 %v133, %v131
    %v188 = vunpack.c.l.b16 %v68
    %v189 = vunpack.c.h.b16 %v68
    %v190 = vunpack.c.l.b16 %v69
    %v191 = vunpack.c.h.b16 %v69
    %v192 = vunpack.c.l.b16 %v70
    %v193 = vunpack.c.h.b16 %v70
    %v194 = vunpack.c.l.b16 %v71
    %v195 = vunpack.c.h.b16 %v71
    %v196 = vunpack.c.l.b16 %v72
    %v197 = vunpack.c.h.b16 %v72
    %v198 = vunpack.c.l.b16 %v73
    %v199 = vunpack.c.h.b16 %v73
    %v200 = vunpack.c.l.b16 %v74
    %v201 = vunpack.c.h.b16 %v74
    %v202 = vunpack.c.l.b16 %v75
    %v203 = vunpack.c.h.b16 %v75
    %v204 = vunpack.c.l.b16 %v76
    %v205 = vunpack.c.h.b16 %v76
    %v206 = vunpack.c.l.b16 %v77
    %v207 = vunpack.c.h.b16 %v77
    %v208 = vunpack.c.l.b16 %v78
    %v209 = vunpack.c.h.b16 %v78
    %v210 = vunpack.c.l.b16 %v79
    %v211 = vunpack.c.h.b16 %v79
    %v212 = vunpack.c.l.b16 %v80
    %v213 = vunpack.c.h.b16 %v80
    %v214 = vunpack.c.l.b16 %v81
    %v215 = vunpack.c.h.b16 %v81
    %v216 = vunpack.c.l.b16 %v82
    %v217 = vunpack.c.h.b16 %v82
    %v218 = vunpack.c.l.b16 %v83
    %v219 = vunpack.c.h.b16 %v83
    %v220 = vunpack.c.l.b16 %v84
    %v221 = vunpack.c.h.b16 %v84
    %v222 = vunpack.c.l.b16 %v85
    %v223 = vunpack.c.h.b16 %v85
    %v224 = vunpack.c.l.b16 %v86
    %v225 = vunpack.c.h.b16 %v86
    %v226 = vunpack.c.l.b16 %v87
    %v227 = vunpack.c.h.b16 %v87
    %v228 = vunpack.c.l.b16 %v88
    %v229 = vunpack.c.h.b16 %v88
    %v230 = vunpack.c.l.b16 %v89
    %v231 = vunpack.c.h.b16 %v89
    %v232 = vunpack.c.l.b16 %v90
    %v233 = vunpack.c.h.b16 %v90
    %v234 = vunpack.c.l.b16 %v91
    %v235 = vunpack.c.h.b16 %v91
    %v236 = vunpack.c.l.b16 %v92
    %v237 = vunpack.c.h.b16 %v92
    %v238 = vunpack.c.l.b16 %v93
    %v239 = vunpack.c.h.b16 %v93
    %v240 = vunpack.c.l.b16 %v94
    %v241 = vunpack.c.h.b16 %v94
    %v242 = vunpack.c.l.b16 %v95
    %v243 = vunpack.c.h.b16 %v95
    %v244 = vunpack.c.l.b16 %v96
    %v245 = vunpack.c.h.b16 %v96
    %v246 = vunpack.c.l.b16 %v97
    %v247 = vunpack.c.h.b16 %v97
    %v248 = vunpack.c.l.b16 %v98
    %v249 = vunpack.c.h.b16 %v98
    %v250 = vunpack.c.l.b16 %v99
    %v251 = vunpack.c.h.b16 %v99
    %v252 = vunpack.c.l.b16 %v100
    %v253 = vunpack.c.h.b16 %v100
    %v254 = vunpack.c.l.b16 %v101
    %v255 = vunpack.c.h.b16 %v101
    %v256 = vunpack.c.l.b16 %v102
    %v257 = vunpack.c.h.b16 %v102
    %v258 = vunpack.c.l.b16 %v103
    %v259 = vunpack.c.h.b16 %v103
    %v260 = vunpack.c.l.b16 %v104
    %v261 = vunpack.c.h.b16 %v104
    %v262 = vunpack.c.l.b16 %v105
    %v263 = vunpack.c.h.b16 %v105
    %v264 = vunpack.c.l.b16 %v106
    %v265 = vunpack.c.h.b16 %v106
    %v266 = vunpack.c.l.b16 %v107
    %v267 = vunpack.c.h.b16 %v107
    %v268 = vunpack.c.l.b16 %v108
    %v269 = vunpack.c.h.b16 %v108
    %v270 = vunpack.c.l.b16 %v109
    %v271 = vunpack.c.h.b16 %v109
    %v272 = vpack.c.b16 %v192, %v188
    %v273 = vpack.c.b16 %v193, %v189
    %v274 = vpack.c.b16 %v194, %v190
    %v275 = vpack.c.b16 %v195, %v191
    %v276 = vpack.c.b16 %v200, %v196
    %v277 = vpack.c.b16 %v201, %v197
    %v278 = vpack.c.b16 %v202, %v198
    %v279 = vpack.c.b16 %v203, %v199
    %v280 = vpack.c.b16 %v208, %v204
    %v281 = vpack.c.b16 %v209, %v205
    %v282 = vpack.c.b16 %v210, %v206
    %v283 = vpack.c.b16 %v211, %v207
    %v284 = vpack.c.b16 %v216, %v212
    %v285 = vpack.c.b16 %v217, %v213
    %v286 = vpack.c.b16 %v218, %v214
    %v287 = vpack.c.b16 %v219, %v215
    %v288 = vpack.c.b16 %v224, %v220
    %v289 = vpack.c.b16 %v225, %v221
    %v290 = vpack.c.b16 %v226, %v222
    %v291 = vpack.c.b16 %v227, %v223
    %v292 = vpack.c.b16 %v232, %v228
    %v293 = vpack.c.b16 %v233, %v229
    %v294 = vpack.c.b16 %v234, %v230
    %v295 = vpack.c.b16 %v235, %v231
    %v296 = vpack.c.b16 %v240, %v236
    %v297 = vpack.c.b16 %v241, %v237
    %v298 = vpack.c.b16 %v242, %v238
    %v299 = vpack.c.b16 %v243, %v239
    %v300 = vpack.c.b16 %v248, %v244
    %v301 = vpack.c.b16 %v249, %v245
    %v302 = vpack.c.b16 %v250, %v246
    %v303 = vpack.c.b16 %v251, %v247
    %v304 = vpack.c.b16 %v256, %v252
    %v305 = vpack.c.b16 %v257, %v253
    %v306 = vpack.c.b16 %v258, %v254
    %v307 = vpack.c.b16 %v259, %v255
    %v308 = vpack.c.b16 %v264, %v260
    %v309 = vpack.c.b16 %v265, %v261
    %v310 = vpack.c.b16 %v266, %v262
    %v311 = vpack.c.b16 %v267, %v263
    %v312 = vpack.c.b16 %v268, %v268
    %v313 = vpack.c.b16 %v269, %v269
    %v314 = vpack.c.b16 %v270, %v270
    %v315 = vpack.c.b16 %v271, %v271
    %vm356 = vcmask 326656
    %v358 = vsel %vm356, %v135, 0
    %v361 = vsel %vm356, %v137, 0
    %v364 = vsel %vm356, %v139, 0
    %v367 = vsel %vm356, %v141, 0
    %vm369 = vcmask 1043456
    %v371 = vsel %vm369, %v312, 0
    %v374 = vsel %vm369, %v313, 0
    %v377 = vsel %vm369, %v314, 0
    %v380 = vsel %vm369, %v315, 0
    %382 = vmatprep.subr.bf16.mxu0 %v301
    %383 = vmatpush1.bf16.msra.mxu0 %v300
    %384 = vmatprep.subr.bf16.mxu0 %v297
    %385 = vmatpush1.bf16.msra.mxu0 %v296
    %386 = vmatprep.subr.bf16.mxu0 %v293
    %387 = vmatpush1.bf16.msra.mxu0 %v292
    %388 = vmatprep.subr.bf16.mxu0 %v289
    %389 = vmatpush1.bf16.msra.mxu0 %v288
    %390 = vmatprep.subr.bf16.mxu0 %v285
    %391 = vmatpush1.bf16.msra.mxu0 %v284
    %392 = vmatprep.subr.bf16.mxu0 %v281
    %393 = vmatpush1.bf16.msra.mxu0 %v280
    %394 = vmatprep.subr.bf16.mxu0 %v277
    %395 = vmatpush1.bf16.msra.mxu0 %v276
    %396 = vmatprep.subr.bf16.mxu0 %v273
    %397 = vmatpush1.bf16.msra.mxu0 %v272
    %398 = vmatprep.subr.bf16.mxu0 0
    %399 = vmatpush2.bf16.msra.mxu0 0
    %400 = vmatprep.subr.bf16.mxu0 0
    %401 = vmatpush2.bf16.msra.mxu0 0
    %402 = vmatprep.subr.bf16.mxu0 0
    %403 = vmatpush2.bf16.msra.mxu0 0
    %404 = vmatprep.subr.bf16.mxu0 0
    %405 = vmatpush2.bf16.msra.mxu0 0
    %406 = vmatprep.subr.bf16.mxu0 0
    %407 = vmatpush2.bf16.msra.mxu0 0
    %408 = vmatprep.subr.bf16.mxu0 %v374
    %409 = vmatpush2.bf16.msra.mxu0 %v371
    %410 = vmatprep.subr.bf16.mxu0 %v309
    %411 = vmatpush2.bf16.msra.mxu0 %v308
    %412 = vmatprep.subr.bf16.mxu0 %v305
    %413 = vmatpush2.bf16.msra.mxu0 %v304
    %414 = vmatprep.mubr.bf16.mxu0 %v358
    %415 = vmatmul.mubr.bf16.gmra.mxu0 %v134
    %v416 = vpop.f32.mrf.mxu0
    %v417 = vadd.f32 0.0, %v416
    %v418 = vpop.f32.mrf.mxu0
    %v419 = vadd.f32 0.0, %v418
    %v420 = vpop.f32.mrf.mxu0
    %v421 = vadd.f32 0.0, %v420
    %v422 = vpop.f32.mrf.mxu0
    %v423 = vadd.f32 0.0, %v422
    %424 = vmatprep.mubr.bf16.mxu0 %v361
    %425 = vmatmul.mubr.bf16.gmra.mxu0 %v136
    %v426 = vpop.f32.mrf.mxu0
    %v427 = vadd.f32 0.0, %v426
    %v428 = vpop.f32.mrf.mxu0
    %v429 = vadd.f32 0.0, %v428
    %v430 = vpop.f32.mrf.mxu0
    %v431 = vadd.f32 0.0, %v430
    %v432 = vpop.f32.mrf.mxu0
    %v433 = vadd.f32 0.0, %v432
    %434 = vmatprep.mubr.bf16.mxu0 %v364
    %435 = vmatmul.mubr.bf16.gmra.mxu0 %v138
    %v436 = vpop.f32.mrf.mxu0
    %v437 = vadd.f32 0.0, %v436
    %v438 = vpop.f32.mrf.mxu0
    %v439 = vadd.f32 0.0, %v438
    %v440 = vpop.f32.mrf.mxu0
    %v441 = vadd.f32 0.0, %v440
    %v442 = vpop.f32.mrf.mxu0
    %v443 = vadd.f32 0.0, %v442
    %444 = vmatprep.mubr.bf16.mxu0 %v367
    %445 = vmatmul.mubr.bf16.gmra.mxu0 %v140
    %v446 = vpop.f32.mrf.mxu0
    %v447 = vadd.f32 0.0, %v446
    %v448 = vpop.f32.mrf.mxu0
    %v449 = vadd.f32 0.0, %v448
    %v450 = vpop.f32.mrf.mxu0
    %v451 = vadd.f32 0.0, %v450
    %v452 = vpop.f32.mrf.mxu0
    %v453 = vadd.f32 0.0, %v452
    %454 = vdwg.mxu0
    %455 = vmatprep.subr.bf16.mxu0 %v303
    %456 = vmatpush1.bf16.msra.mxu0 %v302
    %457 = vmatprep.subr.bf16.mxu0 %v299
    %458 = vmatpush1.bf16.msra.mxu0 %v298
    %459 = vmatprep.subr.bf16.mxu0 %v295
    %460 = vmatpush1.bf16.msra.mxu0 %v294
    %461 = vmatprep.subr.bf16.mxu0 %v291
    %462 = vmatpush1.bf16.msra.mxu0 %v290
    %463 = vmatprep.subr.bf16.mxu0 %v287
    %464 = vmatpush1.bf16.msra.mxu0 %v286
    %465 = vmatprep.subr.bf16.mxu0 %v283
    %466 = vmatpush1.bf16.msra.mxu0 %v282
    %467 = vmatprep.subr.bf16.mxu0 %v279
    %468 = vmatpush1.bf16.msra.mxu0 %v278
    %469 = vmatprep.subr.bf16.mxu0 %v275
    %470 = vmatpush1.bf16.msra.mxu0 %v274
    %471 = vmatprep.subr.bf16.mxu0 0
    %472 = vmatpush2.bf16.msra.mxu0 0
    %473 = vmatprep.subr.bf16.mxu0 0
    %474 = vmatpush2.bf16.msra.mxu0 0
    %475 = vmatprep.subr.bf16.mxu0 0
    %476 = vmatpush2.bf16.msra.mxu0 0
    %477 = vmatprep.subr.bf16.mxu0 0
    %478 = vmatpush2.bf16.msra.mxu0 0
    %479 = vmatprep.subr.bf16.mxu0 0
    %480 = vmatpush2.bf16.msra.mxu0 0
    %481 = vmatprep.subr.bf16.mxu0 %v380
    %482 = vmatpush2.bf16.msra.mxu0 %v377
    %483 = vmatprep.subr.bf16.mxu0 %v311
    %484 = vmatpush2.bf16.msra.mxu0 %v310
    %485 = vmatprep.subr.bf16.mxu0 %v307
    %486 = vmatpush2.bf16.msra.mxu0 %v306
    %487 = vmatprep.mubr.bf16.mxu0 %v358
    %488 = vmatmul.mubr.bf16.gmra.mxu0 %v134
    %v489 = vpop.f32.mrf.mxu0
    %v490 = vadd.f32 0.0, %v489
    %v491 = vpop.f32.mrf.mxu0
    %v492 = vadd.f32 0.0, %v491
    %v493 = vpop.f32.mrf.mxu0
    %v494 = vadd.f32 0.0, %v493
    %v495 = vpop.f32.mrf.mxu0
    %v496 = vadd.f32 0.0, %v495
    %497 = vmatprep.mubr.bf16.mxu0 %v361
    %498 = vmatmul.mubr.bf16.gmra.mxu0 %v136
    %v499 = vpop.f32.mrf.mxu0
    %v500 = vadd.f32 0.0, %v499
    %v501 = vpop.f32.mrf.mxu0
    %v502 = vadd.f32 0.0, %v501
    %v503 = vpop.f32.mrf.mxu0
    %v504 = vadd.f32 0.0, %v503
    %v505 = vpop.f32.mrf.mxu0
    %v506 = vadd.f32 0.0, %v505
    %507 = vmatprep.mubr.bf16.mxu0 %v364
    %508 = vmatmul.mubr.bf16.gmra.mxu0 %v138
    %v509 = vpop.f32.mrf.mxu0
    %v510 = vadd.f32 0.0, %v509
    %v511 = vpop.f32.mrf.mxu0
    %v512 = vadd.f32 0.0, %v511
    %v513 = vpop.f32.mrf.mxu0
    %v514 = vadd.f32 0.0, %v513
    %v515 = vpop.f32.mrf.mxu0
    %v516 = vadd.f32 0.0, %v515
    %517 = vmatprep.mubr.bf16.mxu0 %v367
    %518 = vmatmul.mubr.bf16.gmra.mxu0 %v140
    %v519 = vpop.f32.mrf.mxu0
    %v520 = vadd.f32 0.0, %v519
    %v521 = vpop.f32.mrf.mxu0
    %v522 = vadd.f32 0.0, %v521
    %v523 = vpop.f32.mrf.mxu0
    %v524 = vadd.f32 0.0, %v523
    %v525 = vpop.f32.mrf.mxu0
    %v526 = vadd.f32 0.0, %v525
    %527 = vdwg.mxu0
    %v528 = vmax.f32 %v417, 0.0
    %v529 = vmax.f32 %v419, 0.0
    %v530 = vmax.f32 %v490, 0.0
    %v531 = vmax.f32 %v492, 0.0
    %v532 = vmax.f32 %v421, 0.0
    %v533 = vmax.f32 %v423, 0.0
    %v534 = vmax.f32 %v494, 0.0
    %v535 = vmax.f32 %v496, 0.0
    %v536 = vmax.f32 %v427, 0.0
    %v537 = vmax.f32 %v429, 0.0
    %v538 = vmax.f32 %v500, 0.0
    %v539 = vmax.f32 %v502, 0.0
    %v540 = vmax.f32 %v431, 0.0
    %v541 = vmax.f32 %v433, 0.0
    %v542 = vmax.f32 %v504, 0.0
    %v543 = vmax.f32 %v506, 0.0
    %v544 = vmax.f32 %v437, 0.0
    %v545 = vmax.f32 %v439, 0.0
    %v546 = vmax.f32 %v510, 0.0
    %v547 = vmax.f32 %v512, 0.0
    %v548 = vmax.f32 %v441, 0.0
    %v549 = vmax.f32 %v443, 0.0
    %v550 = vmax.f32 %v514, 0.0
    %v551 = vmax.f32 %v516, 0.0
    %v552 = vmax.f32 %v447, 0.0
    %v553 = vmax.f32 %v449, 0.0
    %v554 = vmax.f32 %v520, 0.0
    %v555 = vmax.f32 %v522, 0.0
    %v556 = vmax.f32 %v451, 0.0
    %v557 = vmax.f32 %v453, 0.0
    %v558 = vmax.f32 %v524, 0.0
    %v559 = vmax.f32 %v526, 0.0
    %v560 = vlaneseq
    %v561 = vshrl.u32 %v560, 7
    %vm562 = vcmp.lt.s32.totalorder %v561, 8
    %v563 = vsel %vm562, 1, 0
    %vm564 = vcmp.eq.s32.totalorder %v563, 1
    %v565 = vsel %vm564, %v528, -1.0
    %v566 = vsel %vm564, %v532, -1.0
    %v567 = vsel %vm564, %v536, -1.0
    %v568 = vsel %vm564, %v540, -1.0
    %v569 = vsel %vm564, %v544, -1.0
    %v570 = vsel %vm564, %v548, -1.0
    %v571 = vsel %vm564, %v552, -1.0
    %v572 = vsel %vm564, %v556, -1.0
    %v573 = vrot.slane %v565, 4
    %v574 = vmax.f32 %v565, %v573
    %v575 = vrot.slane %v574, 2
    %v576 = vmax.f32 %v574, %v575
    %v577 = vrot.slane %v576, 1
    %v578 = vmax.f32 %v576, %v577
    %v579 = vrot.slane %v566, 4
    %v580 = vmax.f32 %v566, %v579
    %v581 = vrot.slane %v580, 2
    %v582 = vmax.f32 %v580, %v581
    %v583 = vrot.slane %v582, 1
    %v584 = vmax.f32 %v582, %v583
    %v585 = vrot.slane %v567, 4
    %v586 = vmax.f32 %v567, %v585
    %v587 = vrot.slane %v586, 2
    %v588 = vmax.f32 %v586, %v587
    %v589 = vrot.slane %v588, 1
    %v590 = vmax.f32 %v588, %v589
    %v591 = vrot.slane %v568, 4
    %v592 = vmax.f32 %v568, %v591
    %v593 = vrot.slane %v592, 2
    %v594 = vmax.f32 %v592, %v593
    %v595 = vrot.slane %v594, 1
    %v596 = vmax.f32 %v594, %v595
    %v597 = vrot.slane %v569, 4
    %v598 = vmax.f32 %v569, %v597
    %v599 = vrot.slane %v598, 2
    %v600 = vmax.f32 %v598, %v599
    %v601 = vrot.slane %v600, 1
    %v602 = vmax.f32 %v600, %v601
    %v603 = vrot.slane %v570, 4
    %v604 = vmax.f32 %v570, %v603
    %v605 = vrot.slane %v604, 2
    %v606 = vmax.f32 %v604, %v605
    %v607 = vrot.slane %v606, 1
    %v608 = vmax.f32 %v606, %v607
    %v609 = vrot.slane %v571, 4
    %v610 = vmax.f32 %v571, %v609
    %v611 = vrot.slane %v610, 2
    %v612 = vmax.f32 %v610, %v611
    %v613 = vrot.slane %v612, 1
    %v614 = vmax.f32 %v612, %v613
    %v615 = vrot.slane %v572, 4
    %v616 = vmax.f32 %v572, %v615
    %v617 = vrot.slane %v616, 2
    %v618 = vmax.f32 %v616, %v617
    %v619 = vrot.slane %v618, 1
    %v620 = vmax.f32 %v618, %v619
    %vm621 = vcmp.lt.s32.totalorder %v561, 7
    %v622 = vsel %vm621, 1, 0
    %vm623 = vcmp.eq.s32.totalorder %v622, 1
    %v624 = vsel %vm623, %v529, -1.0
    %v625 = vsel %vm623, %v533, -1.0
    %v626 = vsel %vm623, %v537, -1.0
    %v627 = vsel %vm623, %v541, -1.0
    %v628 = vsel %vm623, %v545, -1.0
    %v629 = vsel %vm623, %v549, -1.0
    %v630 = vsel %vm623, %v553, -1.0
    %v631 = vsel %vm623, %v557, -1.0
    %v632 = vrot.slane %v624, 4
    %v633 = vmax.f32 %v624, %v632
    %v634 = vrot.slane %v633, 2
    %v635 = vmax.f32 %v633, %v634
    %v636 = vrot.slane %v635, 1
    %v637 = vmax.f32 %v635, %v636
    %v638 = vrot.slane %v625, 4
    %v639 = vmax.f32 %v625, %v638
    %v640 = vrot.slane %v639, 2
    %v641 = vmax.f32 %v639, %v640
    %v642 = vrot.slane %v641, 1
    %v643 = vmax.f32 %v641, %v642
    %v644 = vrot.slane %v626, 4
    %v645 = vmax.f32 %v626, %v644
    %v646 = vrot.slane %v645, 2
    %v647 = vmax.f32 %v645, %v646
    %v648 = vrot.slane %v647, 1
    %v649 = vmax.f32 %v647, %v648
    %v650 = vrot.slane %v627, 4
    %v651 = vmax.f32 %v627, %v650
    %v652 = vrot.slane %v651, 2
    %v653 = vmax.f32 %v651, %v652
    %v654 = vrot.slane %v653, 1
    %v655 = vmax.f32 %v653, %v654
    %v656 = vrot.slane %v628, 4
    %v657 = vmax.f32 %v628, %v656
    %v658 = vrot.slane %v657, 2
    %v659 = vmax.f32 %v657, %v658
    %v660 = vrot.slane %v659, 1
    %v661 = vmax.f32 %v659, %v660
    %v662 = vrot.slane %v629, 4
    %v663 = vmax.f32 %v629, %v662
    %v664 = vrot.slane %v663, 2
    %v665 = vmax.f32 %v663, %v664
    %v666 = vrot.slane %v665, 1
    %v667 = vmax.f32 %v665, %v666
    %v668 = vrot.slane %v630, 4
    %v669 = vmax.f32 %v630, %v668
    %v670 = vrot.slane %v669, 2
    %v671 = vmax.f32 %v669, %v670
    %v672 = vrot.slane %v671, 1
    %v673 = vmax.f32 %v671, %v672
    %v674 = vrot.slane %v631, 4
    %v675 = vmax.f32 %v631, %v674
    %v676 = vrot.slane %v675, 2
    %v677 = vmax.f32 %v675, %v676
    %v678 = vrot.slane %v677, 1
    %v679 = vmax.f32 %v677, %v678
    %vm680 = vcmp.lt.s32.totalorder %v561, 6
    %v681 = vsel %vm680, 1, 0
    %vm682 = vcmp.eq.s32.totalorder %v681, 1
    %v683 = vsel %vm682, %v530, -1.0
    %v684 = vsel %vm682, %v534, -1.0
    %v685 = vsel %vm682, %v538, -1.0
    %v686 = vsel %vm682, %v542, -1.0
    %v687 = vsel %vm682, %v546, -1.0
    %v688 = vsel %vm682, %v550, -1.0
    %v689 = vsel %vm682, %v554, -1.0
    %v690 = vsel %vm682, %v558, -1.0
    %v691 = vrot.slane %v683, 4
    %v692 = vmax.f32 %v683, %v691
    %v693 = vrot.slane %v692, 2
    %v694 = vmax.f32 %v692, %v693
    %v695 = vrot.slane %v694, 1
    %v696 = vmax.f32 %v694, %v695
    %v697 = vrot.slane %v684, 4
    %v698 = vmax.f32 %v684, %v697
    %v699 = vrot.slane %v698, 2
    %v700 = vmax.f32 %v698, %v699
    %v701 = vrot.slane %v700, 1
    %v702 = vmax.f32 %v700, %v701
    %v703 = vrot.slane %v685, 4
    %v704 = vmax.f32 %v685, %v703
    %v705 = vrot.slane %v704, 2
    %v706 = vmax.f32 %v704, %v705
    %v707 = vrot.slane %v706, 1
    %v708 = vmax.f32 %v706, %v707
    %v709 = vrot.slane %v686, 4
    %v710 = vmax.f32 %v686, %v709
    %v711 = vrot.slane %v710, 2
    %v712 = vmax.f32 %v710, %v711
    %v713 = vrot.slane %v712, 1
    %v714 = vmax.f32 %v712, %v713
    %v715 = vrot.slane %v687, 4
    %v716 = vmax.f32 %v687, %v715
    %v717 = vrot.slane %v716, 2
    %v718 = vmax.f32 %v716, %v717
    %v719 = vrot.slane %v718, 1
    %v720 = vmax.f32 %v718, %v719
    %v721 = vrot.slane %v688, 4
    %v722 = vmax.f32 %v688, %v721
    %v723 = vrot.slane %v722, 2
    %v724 = vmax.f32 %v722, %v723
    %v725 = vrot.slane %v724, 1
    %v726 = vmax.f32 %v724, %v725
    %v727 = vrot.slane %v689, 4
    %v728 = vmax.f32 %v689, %v727
    %v729 = vrot.slane %v728, 2
    %v730 = vmax.f32 %v728, %v729
    %v731 = vrot.slane %v730, 1
    %v732 = vmax.f32 %v730, %v731
    %v733 = vrot.slane %v690, 4
    %v734 = vmax.f32 %v690, %v733
    %v735 = vrot.slane %v734, 2
    %v736 = vmax.f32 %v734, %v735
    %v737 = vrot.slane %v736, 1
    %v738 = vmax.f32 %v736, %v737
    %vm739 = vcmp.lt.s32.totalorder %v561, 4
    %v740 = vsel %vm739, 1, 0
    %vm741 = vcmp.eq.s32.totalorder %v740, 1
    %v742 = vsel %vm741, %v531, -1.0
    %v743 = vsel %vm741, %v535, -1.0
    %v744 = vsel %vm741, %v539, -1.0
    %v745 = vsel %vm741, %v543, -1.0
    %v746 = vsel %vm741, %v547, -1.0
    %v747 = vsel %vm741, %v551, -1.0
    %v748 = vsel %vm741, %v555, -1.0
    %v749 = vsel %vm741, %v559, -1.0
    %v750 = vrot.slane %v742, 4
    %v751 = vmax.f32 %v742, %v750
    %v752 = vrot.slane %v751, 2
    %v753 = vmax.f32 %v751, %v752
    %v754 = vrot.slane %v753, 1
    %v755 = vmax.f32 %v753, %v754
    %v756 = vrot.slane %v743, 4
    %v757 = vmax.f32 %v743, %v756
    %v758 = vrot.slane %v757, 2
    %v759 = vmax.f32 %v757, %v758
    %v760 = vrot.slane %v759, 1
    %v761 = vmax.f32 %v759, %v760
    %v762 = vrot.slane %v744, 4
    %v763 = vmax.f32 %v744, %v762
    %v764 = vrot.slane %v763, 2
    %v765 = vmax.f32 %v763, %v764
    %v766 = vrot.slane %v765, 1
    %v767 = vmax.f32 %v765, %v766
    %v768 = vrot.slane %v745, 4
    %v769 = vmax.f32 %v745, %v768
    %v770 = vrot.slane %v769, 2
    %v771 = vmax.f32 %v769, %v770
    %v772 = vrot.slane %v771, 1
    %v773 = vmax.f32 %v771, %v772
    %v774 = vrot.slane %v746, 4
    %v775 = vmax.f32 %v746, %v774
    %v776 = vrot.slane %v775, 2
    %v777 = vmax.f32 %v775, %v776
    %v778 = vrot.slane %v777, 1
    %v779 = vmax.f32 %v777, %v778
    %v780 = vrot.slane %v747, 4
    %v781 = vmax.f32 %v747, %v780
    %v782 = vrot.slane %v781, 2
    %v783 = vmax.f32 %v781, %v782
    %v784 = vrot.slane %v783, 1
    %v785 = vmax.f32 %v783, %v784
    %v786 = vrot.slane %v748, 4
    %v787 = vmax.f32 %v748, %v786
    %v788 = vrot.slane %v787, 2
    %v789 = vmax.f32 %v787, %v788
    %v790 = vrot.slane %v789, 1
    %v791 = vmax.f32 %v789, %v790
    %v792 = vrot.slane %v749, 4
    %v793 = vmax.f32 %v749, %v792
    %v794 = vrot.slane %v793, 2
    %v795 = vmax.f32 %v793, %v794
    %v796 = vrot.slane %v795, 1
    %v797 = vmax.f32 %v795, %v796
    %vm806 = vcmask 1041409
    %v807 = vsel %vm806, %v584, %v578
    %vm808 = vcmask 1042434
    %v809 = vsel %vm808, %v590, %v807
    %vm810 = vcmask 1043459
    %v811 = vsel %vm810, %v596, %v809
    %vm812 = vcmask 1044484
    %v813 = vsel %vm812, %v602, %v811
    %vm814 = vcmask 1045509
    %v815 = vsel %vm814, %v608, %v813
    %vm816 = vcmask 1046534
    %v817 = vsel %vm816, %v614, %v815
    %vm818 = vcmask 1047559
    %v819 = vsel %vm818, %v620, %v817
    %v829 = vsel %vm806, %v643, %v637
    %v830 = vsel %vm808, %v649, %v829
    %v831 = vsel %vm810, %v655, %v830
    %v832 = vsel %vm812, %v661, %v831
    %v833 = vsel %vm814, %v667, %v832
    %v834 = vsel %vm816, %v673, %v833
    %v835 = vsel %vm818, %v679, %v834
    %v845 = vsel %vm806, %v702, %v696
    %v846 = vsel %vm808, %v708, %v845
    %v847 = vsel %vm810, %v714, %v846
    %v848 = vsel %vm812, %v720, %v847
    %v849 = vsel %vm814, %v726, %v848
    %v850 = vsel %vm816, %v732, %v849
    %v851 = vsel %vm818, %v738, %v850
    %v861 = vsel %vm806, %v761, %v755
    %v862 = vsel %vm808, %v767, %v861
    %v863 = vsel %vm810, %v773, %v862
    %v864 = vsel %vm812, %v779, %v863
    %v865 = vsel %vm814, %v785, %v864
    %v866 = vsel %vm816, %v791, %v865
    %v867 = vsel %vm818, %v797, %v866
    %v869 = vpack.c.bf16 %v819, %v819
    %v870 = vpack.c.bf16 %v835, %v835
    %v871 = vpack.c.bf16 %v851, %v851
    %v872 = vpack.c.bf16 %v867, %v867
    %v873 = vld [vmem:[#allocation7] sm:$0xf]
    %v874 = vld [vmem:[#allocation7 + $0x4] sm:$0xf]
    %v875 = vld [vmem:[#allocation7 + $0x8] sm:$0xf]
    %v876 = vld [vmem:[#allocation7 + $0xc] sm:$0xf]
    %v877 = vld [vmem:[#allocation7 + $0x10] sm:$0xf]
    %v878 = vld [vmem:[#allocation7 + $0x14] sm:$0xf]
    %v879 = vld [vmem:[#allocation7 + $0x18] sm:$0xf]
    %v880 = vld [vmem:[#allocation7 + $0x1c] sm:$0xf]
    %v881 = vld [vmem:[#allocation7 + $0x20] sm:$0xf]
    %v882 = vld [vmem:[#allocation7 + $0x24] sm:$0xf]
    %v883 = vld [vmem:[#allocation7 + $0x28] sm:$0xf]
    %v884 = vld [vmem:[#allocation7 + $0x2c] sm:$0xf]
    %v885 = vld [vmem:[#allocation7 + $0x30] sm:$0xf]
    %v886 = vld [vmem:[#allocation7 + $0x34] sm:$0xf]
    %v887 = vld [vmem:[#allocation7 + $0x38] sm:$0xf]
    %v888 = vld [vmem:[#allocation7 + $0x3c] sm:$0xf]
    %v889 = vld [vmem:[#allocation7 + $0x40] sm:$0xf]
    %v890 = vld [vmem:[#allocation7 + $0x44] sm:$0xf]
    %v891 = vld [vmem:[#allocation7 + $0x48] sm:$0xf]
    %v892 = vld [vmem:[#allocation7 + $0x4c] sm:$0xf]
    %v893 = vld [vmem:[#allocation7 + $0x50] sm:$0xf]
    %v894 = vld [vmem:[#allocation7 + $0x54] sm:$0xf]
    %v895 = vld [vmem:[#allocation7 + $0x58] sm:$0xf]
    %v896 = vld [vmem:[#allocation7 + $0x5c] sm:$0xf]
    %v897 = vld [vmem:[#allocation7 + $0x60] sm:$0xf]
    %v898 = vld [vmem:[#allocation7 + $0x64] sm:$0xf]
    %v899 = vld [vmem:[#allocation7 + $0x68] sm:$0xf]
    %v900 = vld [vmem:[#allocation7 + $0x6c] sm:$0xf]
    %v901 = vld [vmem:[#allocation7 + $0x70] sm:$0xf]
    %v902 = vld [vmem:[#allocation7 + $0x74] sm:$0xf]
    %v903 = vld [vmem:[#allocation7 + $0x78] sm:$0xf]
    %v904 = vld [vmem:[#allocation7 + $0x7c] sm:$0xf]
    %v905 = vld [vmem:[#allocation7 + $0x80] sm:$0xf]
    %v906 = vld [vmem:[#allocation7 + $0x84] sm:$0xf]
    %v907 = vld [vmem:[#allocation7 + $0x88] sm:$0xf]
    %v908 = vld [vmem:[#allocation7 + $0x8c] sm:$0xf]
    %v909 = vld [vmem:[#allocation7 + $0x90] sm:$0xf]
    %v910 = vld [vmem:[#allocation7 + $0x94] sm:$0xf]
    %v911 = vld [vmem:[#allocation7 + $0x98] sm:$0xf]
    %v912 = vld [vmem:[#allocation7 + $0x9c] sm:$0xf]
    %v913 = vld [vmem:[#allocation7 + $0xa0] sm:$0xf]
    %v914 = vld [vmem:[#allocation7 + $0xa4] sm:$0xf]
    %v915 = vld [vmem:[#allocation7 + $0xa8] sm:$0xf]
    %v916 = vld [vmem:[#allocation7 + $0xac] sm:$0xf]
    %v917 = vld [vmem:[#allocation7 + $0xb0] sm:$0xf]
    %v918 = vld [vmem:[#allocation7 + $0xb4] sm:$0xf]
    %v919 = vld [vmem:[#allocation7 + $0xb8] sm:$0xf]
    %v920 = vld [vmem:[#allocation7 + $0xbc] sm:$0xf]
    %v921 = vld [vmem:[#allocation7 + $0xc0] sm:$0xf]
    %v922 = vld [vmem:[#allocation7 + $0xc4] sm:$0xf]
    %v923 = vld [vmem:[#allocation7 + $0xc8] sm:$0xf]
    %v924 = vld [vmem:[#allocation7 + $0xcc] sm:$0xf]
    %v925 = vld [vmem:[#allocation7 + $0xd0] sm:$0xf]
    %v926 = vld [vmem:[#allocation7 + $0xd4] sm:$0xf]
    %v927 = vld [vmem:[#allocation7 + $0xd8] sm:$0xf]
    %v928 = vld [vmem:[#allocation7 + $0xdc] sm:$0xf]
    %v929 = vld [vmem:[#allocation7 + $0xe0] sm:$0xf]
    %v930 = vld [vmem:[#allocation7 + $0xe4] sm:$0xf]
    %v931 = vld [vmem:[#allocation7 + $0xe8] sm:$0xf]
    %v932 = vld [vmem:[#allocation7 + $0xec] sm:$0xf]
    %v933 = vld [vmem:[#allocation7 + $0xf0] sm:$0xf]
    %v934 = vld [vmem:[#allocation7 + $0xf4] sm:$0xf]
    %v935 = vld [vmem:[#allocation7 + $0xf8] sm:$0xf]
    %v936 = vld [vmem:[#allocation7 + $0xfc] sm:$0xf]
    %v937 = vld [vmem:[%s3] sm:$0x1]
    %v939 = vlaneseq
    %v940 = vshrl.u32 %v939, 7
    %v941 = vsub.s32 0, %v940
    %v942 = vrot.slane %v937, %v941
    %v1008 = vunpack.c.l.b16 %v873
    %v1009 = vunpack.c.l.b16 %v874
    %v1010 = vunpack.c.l.b16 %v875
    %v1011 = vunpack.c.l.b16 %v876
    %v1012 = vunpack.c.l.b16 %v877
    %v1013 = vunpack.c.l.b16 %v878
    %v1014 = vunpack.c.l.b16 %v879
    %v1015 = vunpack.c.l.b16 %v880
    %v1016 = vunpack.c.l.b16 %v881
    %v1017 = vunpack.c.l.b16 %v882
    %v1018 = vunpack.c.l.b16 %v883
    %v1019 = vunpack.c.l.b16 %v884
    %v1020 = vunpack.c.l.b16 %v885
    %v1021 = vunpack.c.l.b16 %v886
    %v1022 = vunpack.c.l.b16 %v887
    %v1023 = vunpack.c.l.b16 %v888
    %v1024 = vunpack.c.l.b16 %v889
    %v1025 = vunpack.c.l.b16 %v890
    %v1026 = vunpack.c.l.b16 %v891
    %v1027 = vunpack.c.l.b16 %v892
    %v1028 = vunpack.c.l.b16 %v893
    %v1029 = vunpack.c.l.b16 %v894
    %v1030 = vunpack.c.l.b16 %v895
    %v1031 = vunpack.c.l.b16 %v896
    %v1032 = vunpack.c.l.b16 %v897
    %v1033 = vunpack.c.l.b16 %v898
    %v1034 = vunpack.c.l.b16 %v899
    %v1035 = vunpack.c.l.b16 %v900
    %v1036 = vunpack.c.l.b16 %v901
    %v1037 = vunpack.c.l.b16 %v902
    %v1038 = vunpack.c.l.b16 %v903
    %v1039 = vunpack.c.l.b16 %v904
    %v1040 = vunpack.c.l.b16 %v905
    %v1041 = vunpack.c.l.b16 %v906
    %v1042 = vunpack.c.l.b16 %v907
    %v1043 = vunpack.c.l.b16 %v908
    %v1044 = vunpack.c.l.b16 %v909
    %v1045 = vunpack.c.l.b16 %v910
    %v1046 = vunpack.c.l.b16 %v911
    %v1047 = vunpack.c.l.b16 %v912
    %v1048 = vunpack.c.l.b16 %v913
    %v1049 = vunpack.c.l.b16 %v914
    %v1050 = vunpack.c.l.b16 %v915
    %v1051 = vunpack.c.l.b16 %v916
    %v1052 = vunpack.c.l.b16 %v917
    %v1053 = vunpack.c.l.b16 %v918
    %v1054 = vunpack.c.l.b16 %v919
    %v1055 = vunpack.c.l.b16 %v920
    %v1056 = vunpack.c.l.b16 %v921
    %v1057 = vunpack.c.l.b16 %v922
    %v1058 = vunpack.c.l.b16 %v923
    %v1059 = vunpack.c.l.b16 %v924
    %v1060 = vunpack.c.l.b16 %v925
    %v1061 = vunpack.c.l.b16 %v926
    %v1062 = vunpack.c.l.b16 %v927
    %v1063 = vunpack.c.l.b16 %v928
    %v1064 = vunpack.c.l.b16 %v929
    %v1065 = vunpack.c.l.b16 %v930
    %v1066 = vunpack.c.l.b16 %v931
    %v1067 = vunpack.c.l.b16 %v932
    %v1068 = vunpack.c.l.b16 %v933
    %v1069 = vunpack.c.l.b16 %v934
    %v1070 = vunpack.c.l.b16 %v935
    %v1071 = vunpack.c.l.b16 %v936
    %v1072 = vpack.c.b16 %v1009, %v1008
    %v1073 = vpack.c.b16 %v1011, %v1010
    %v1074 = vpack.c.b16 %v1013, %v1012
    %v1075 = vpack.c.b16 %v1015, %v1014
    %v1076 = vpack.c.b16 %v1017, %v1016
    %v1077 = vpack.c.b16 %v1019, %v1018
    %v1078 = vpack.c.b16 %v1021, %v1020
    %v1079 = vpack.c.b16 %v1023, %v1022
    %v1080 = vpack.c.b16 %v1025, %v1024
    %v1081 = vpack.c.b16 %v1027, %v1026
    %v1082 = vpack.c.b16 %v1029, %v1028
    %v1083 = vpack.c.b16 %v1031, %v1030
    %v1084 = vpack.c.b16 %v1033, %v1032
    %v1085 = vpack.c.b16 %v1035, %v1034
    %v1086 = vpack.c.b16 %v1037, %v1036
    %v1087 = vpack.c.b16 %v1039, %v1038
    %v1088 = vpack.c.b16 %v1041, %v1040
    %v1089 = vpack.c.b16 %v1043, %v1042
    %v1090 = vpack.c.b16 %v1045, %v1044
    %v1091 = vpack.c.b16 %v1047, %v1046
    %v1092 = vpack.c.b16 %v1049, %v1048
    %v1093 = vpack.c.b16 %v1051, %v1050
    %v1094 = vpack.c.b16 %v1053, %v1052
    %v1095 = vpack.c.b16 %v1055, %v1054
    %v1096 = vpack.c.b16 %v1057, %v1056
    %v1097 = vpack.c.b16 %v1059, %v1058
    %v1098 = vpack.c.b16 %v1061, %v1060
    %v1099 = vpack.c.b16 %v1063, %v1062
    %v1100 = vpack.c.b16 %v1065, %v1064
    %v1101 = vpack.c.b16 %v1067, %v1066
    %v1102 = vpack.c.b16 %v1069, %v1068
    %v1103 = vpack.c.b16 %v1071, %v1070
    %1136 = vmatprep.subr.bf16.mxu0 0
    %1137 = vmatpush1.bf16.msra.mxu0 %v1079
    %1138 = vmatprep.subr.bf16.mxu0 0
    %1139 = vmatpush1.bf16.msra.mxu0 %v1078
    %1140 = vmatprep.subr.bf16.mxu0 0
    %1141 = vmatpush1.bf16.msra.mxu0 %v1077
    %1142 = vmatprep.subr.bf16.mxu0 0
    %1143 = vmatpush1.bf16.msra.mxu0 %v1076
    %1144 = vmatprep.subr.bf16.mxu0 0
    %1145 = vmatpush1.bf16.msra.mxu0 %v1075
    %1146 = vmatprep.subr.bf16.mxu0 0
    %1147 = vmatpush1.bf16.msra.mxu0 %v1074
    %1148 = vmatprep.subr.bf16.mxu0 0
    %1149 = vmatpush1.bf16.msra.mxu0 %v1073
    %1150 = vmatprep.subr.bf16.mxu0 0
    %1151 = vmatpush1.bf16.msra.mxu0 %v1072
    %1152 = vmatprep.subr.bf16.mxu0 0
    %1153 = vmatpush2.bf16.msra.mxu0 %v1087
    %1154 = vmatprep.subr.bf16.mxu0 0
    %1155 = vmatpush2.bf16.msra.mxu0 %v1086
    %1156 = vmatprep.subr.bf16.mxu0 0
    %1157 = vmatpush2.bf16.msra.mxu0 %v1085
    %1158 = vmatprep.subr.bf16.mxu0 0
    %1159 = vmatpush2.bf16.msra.mxu0 %v1084
    %1160 = vmatprep.subr.bf16.mxu0 0
    %1161 = vmatpush2.bf16.msra.mxu0 %v1083
    %1162 = vmatprep.subr.bf16.mxu0 0
    %1163 = vmatpush2.bf16.msra.mxu0 %v1082
    %1164 = vmatprep.subr.bf16.mxu0 0
    %1165 = vmatpush2.bf16.msra.mxu0 %v1081
    %1166 = vmatprep.subr.bf16.mxu0 0
    %1167 = vmatpush2.bf16.msra.mxu0 %v1080
    %1168 = vmatprep.mubr.bf16.mxu0 %v870
    %1169 = vmatmul.mubr.bf16.gmra.mxu0 %v869
    %v1170 = vpop.f32.mrf.mxu0
    %v1171 = vadd.f32 %v942, %v1170
    %v1172 = vpop.f32.mrf.mxu0
    %v1173 = vpop.f32.mrf.mxu0
    %v1174 = vpop.f32.mrf.mxu0
    %1175 = vdwg.mxu0
    %1176 = vmatprep.subr.bf16.mxu0 0
    %1177 = vmatpush1.bf16.msra.mxu0 %v1095
    %1178 = vmatprep.subr.bf16.mxu0 0
    %1179 = vmatpush1.bf16.msra.mxu0 %v1094
    %1180 = vmatprep.subr.bf16.mxu0 0
    %1181 = vmatpush1.bf16.msra.mxu0 %v1093
    %1182 = vmatprep.subr.bf16.mxu0 0
    %1183 = vmatpush1.bf16.msra.mxu0 %v1092
    %1184 = vmatprep.subr.bf16.mxu0 0
    %1185 = vmatpush1.bf16.msra.mxu0 %v1091
    %1186 = vmatprep.subr.bf16.mxu0 0
    %1187 = vmatpush1.bf16.msra.mxu0 %v1090
    %1188 = vmatprep.subr.bf16.mxu0 0
    %1189 = vmatpush1.bf16.msra.mxu0 %v1089
    %1190 = vmatprep.subr.bf16.mxu0 0
    %1191 = vmatpush1.bf16.msra.mxu0 %v1088
    %1192 = vmatprep.subr.bf16.mxu0 0
    %1193 = vmatpush2.bf16.msra.mxu0 %v1103
    %1194 = vmatprep.subr.bf16.mxu0 0
    %1195 = vmatpush2.bf16.msra.mxu0 %v1102
    %1196 = vmatprep.subr.bf16.mxu0 0
    %1197 = vmatpush2.bf16.msra.mxu0 %v1101
    %1198 = vmatprep.subr.bf16.mxu0 0
    %1199 = vmatpush2.bf16.msra.mxu0 %v1100
    %1200 = vmatprep.subr.bf16.mxu0 0
    %1201 = vmatpush2.bf16.msra.mxu0 %v1099
    %1202 = vmatprep.subr.bf16.mxu0 0
    %1203 = vmatpush2.bf16.msra.mxu0 %v1098
    %1204 = vmatprep.subr.bf16.mxu0 0
    %1205 = vmatpush2.bf16.msra.mxu0 %v1097
    %1206 = vmatprep.subr.bf16.mxu0 0
    %1207 = vmatpush2.bf16.msra.mxu0 %v1096
    %1208 = vmatprep.mubr.bf16.mxu0 %v872
    %1209 = vmatmul.mubr.bf16.gmra.mxu0 %v871
    %v1210 = vpop.f32.mrf.mxu0
    %v1211 = vadd.f32 %v1171, %v1210
    %v1212 = vpop.f32.mrf.mxu0
    %v1213 = vpop.f32.mrf.mxu0
    %v1214 = vpop.f32.mrf.mxu0
    %1215 = vdwg.mxu0
    %1216 = vst [vmem:[#allocation8] sm:$0xff] %v1211
    // Predicated region
    $region30: #{tpu_custom_call.1} parent=1 // pred_check
      _
    $region31: #{tpu_custom_call.1} parent=1 // pred_check_branch
      %1218 = sbr.rel (0) target = $region33
    $region32: #{tpu_custom_call.1} parent=1 // pred_region
      %s1220 = ssub.s32 128, 128
      %1221 = vsyncadd [#allocation4], %s1220
      %s1223 = sshll.u32 [#allocation8], 4
      %s1224 = int_to_ptr.vmem [resolvable:$true] %s1223
      %1226 = dma.vmem_to_hbm [thread:$0]  %s1224, 128, %s4, [#allocation4]
    $region33: #{tpu_custom_call.1} parent=1 // pred_fallthru
      _
    // Predicated region
    $region34: #{tpu_custom_call.1} parent=1 // pred_check
      _
    $region35: #{tpu_custom_call.1} parent=1 // pred_check_branch
      %1228 = sbr.rel (0) target = $region37
    $region36: #{tpu_custom_call.1} parent=1 // pred_region
      %1229 = dma.done [#allocation4], 128
    $region37: #{tpu_custom_call.1} parent=1 // pred_fallthru
      _
    %1230 = vsyncpa [#allocation3], 1
    %1231 = vsyncpa [#allocation6], 1
    %1232 = vsyncpa [#allocation4], 1

</llo_original>
